<compile_context>
chip_gen: v5e
topology: v5e:2x2
jax: 0.10.0
libtpu: 0.0.40
codegen_flags: <defaults>
</compile_context>

<pallas_src>
import math

import jax
import jax.numpy as jnp
from jax.experimental import pallas as pl
from jax.experimental.pallas import tpu as pltpu


# -----------------------------------------------------------------------------
# Pallas kernels
# -----------------------------------------------------------------------------
def _linear_kernel(x_ref, w_ref, b_ref, o_ref):
    y = jnp.dot(x_ref[...], w_ref[...], preferred_element_type=jnp.float32) + b_ref[...]
    o_ref[...] = y.astype(o_ref.dtype)


def _linear_relu_kernel(x_ref, w_ref, b_ref, o_ref):
    y = jnp.dot(x_ref[...], w_ref[...], preferred_element_type=jnp.float32) + b_ref[...]
    o_ref[...] = jnp.maximum(y, 0.0).astype(o_ref.dtype)


def _bigru_kernel(gx_ref, whh_ref, bhn_ref, y_ref, h_ref):
    """One recurrent step of one direction of a bidirectional GRU layer.

    Grid = (direction, time): the direction axis is "parallel" (2 TCs on v7x),
    time is "arbitrary" and carries the hidden state in VMEM scratch.
    gx_ref holds the hoisted input projection x@W_ih + b_ih + [b_hr, b_hz, 0]
    for this (direction, time) block, so only h@W_hh runs per step.
    PyTorch gate order: r, z, n;  n uses b_hn inside r*( . ).
    """
    t = pl.program_id(1)

    @pl.when(t == 0)
    def _():
        h_ref[...] = jnp.zeros_like(h_ref)

    H = h_ref.shape[-1]
    h = h_ref[...]                    # (B, H) f32 carried state
    gx = gx_ref[0]                    # (B, 3H) f32 pre-activations (biases folded)
    whh = whh_ref[0]                  # (H, 3H) bf16
    gh = jnp.dot(h.astype(whh.dtype), whh, preferred_element_type=jnp.float32)

    r = jax.nn.sigmoid(gx[:, 0 * H:1 * H] + gh[:, 0 * H:1 * H])
    z = jax.nn.sigmoid(gx[:, 1 * H:2 * H] + gh[:, 1 * H:2 * H])
    n = jnp.tanh(gx[:, 2 * H:3 * H] + r * (gh[:, 2 * H:3 * H] + bhn_ref[0]))
    h_new = (1.0 - z) * n + z * h

    h_ref[...] = h_new
    y_ref[0] = h_new.astype(y_ref.dtype)


# -----------------------------------------------------------------------------
# Wrappers
# -----------------------------------------------------------------------------
def _pick_tile(dim, target, quantum):
    """Largest quantum-multiple tile <= target that divides dim (else full dim)."""
    if dim <= target:
        return dim
    t = (target // quantum) * quantum
    while t >= quantum:
        if dim % t == 0:
            return t
        t -= quantum
    return dim


def linear_pallas(x, w, b, *, relu=False, out_dtype=jnp.float32,
                  block_m=256, block_n=512):
    """Tiled y = x @ w + b (optional ReLU). x:(M,K) bf16, w:(K,N) bf16, b:(1,N) f32."""
    M, K = x.shape
    N = w.shape[1]
    bm = _pick_tile(M, block_m, 8)
    bn = _pick_tile(N, block_n, 128)
    kernel = _linear_relu_kernel if relu else _linear_kernel
    return pl.pallas_call(
        kernel,
        out_shape=jax.ShapeDtypeStruct((M, N), out_dtype),
        grid_spec=pltpu.PrefetchScalarGridSpec(
            num_scalar_prefetch=0,
            grid=(M // bm, N // bn),
            in_specs=[
                pl.BlockSpec((bm, K), lambda i, j: (i, 0)),
                pl.BlockSpec((K, bn), lambda i, j: (0, j)),
                pl.BlockSpec((1, bn), lambda i, j: (0, j)),
            ],
            out_specs=pl.BlockSpec((bm, bn), lambda i, j: (i, j)),
        ),
        compiler_params=pltpu.CompilerParams(
            dimension_semantics=("parallel", "parallel"),
        ),
    )(x, w, b)


def bigru_layer_pallas(gx, w_hh, b_hn, H):
    """Bidirectional GRU layer given hoisted input projections.

    gx:   (T, B, 6H) f32  — cols [0:3H] fwd direction, [3H:6H] bwd direction.
    w_hh: (2, H, 3H) bf16 — recurrent weights, [fwd, bwd].
    b_hn: (2, 1, H)  f32  — n-gate hidden bias, [fwd, bwd].
    Returns (T, B, 2H) bf16 — PyTorch bidirectional output layout
    (cols [0:H] forward hidden, [H:2H] backward hidden, both in forward time order).
    """
    T, B, _ = gx.shape

    def t_of(d, t):                       # fwd walks t, bwd walks T-1-t
        return t + d * (T - 1 - 2 * t)

    return pl.pallas_call(
        _bigru_kernel,
        out_shape=jax.ShapeDtypeStruct((T, B, 2 * H), jnp.bfloat16),
        grid_spec=pltpu.PrefetchScalarGridSpec(
            num_scalar_prefetch=0,
            grid=(2, T),
            in_specs=[
                pl.BlockSpec((1, B, 3 * H), lambda d, t: (t_of(d, t), 0, d)),
                pl.BlockSpec((1, H, 3 * H), lambda d, t: (d, 0, 0)),  # resident weights
                pl.BlockSpec((1, 1, H), lambda d, t: (d, 0, 0)),
            ],
            out_specs=pl.BlockSpec((1, B, H), lambda d, t: (t_of(d, t), 0, d)),
            scratch_shapes=[pltpu.VMEM((B, H), jnp.float32)],
        ),
        compiler_params=pltpu.CompilerParams(
            dimension_semantics=("parallel", "arbitrary"),
            # bf16 W_hh (6 MiB at H=1024) + small per-step gx/y blocks stay well
            # inside scoped VMEM on v5e/v6e/v7x; raise the limit for headroom.
            vmem_limit_bytes=48 * 1024 * 1024,
        ),
    )(gx, w_hh, b_hn)


def rnn_forward(x, params):
    """pose_s1: linear1 -> (dropout=identity) -> ReLU -> 2-layer bi-GRU -> linear2.
    x: (B, T, n_input) f32 -> (B, T, n_output) f32."""
    B, T, D = x.shape
    H = params["n_hidden"]

    # Single transpose to time-major; everything downstream stays (T, B, ...) so
    # the GRU walks time purely through index_maps (no per-layer HBM transposes).
    xt = jnp.transpose(x, (1, 0, 2)).reshape(T * B, D).astype(jnp.bfloat16)

    # linear1 + ReLU.  TODO(synk): F.dropout(training=True) randomness omitted (identity).
    h = linear_pallas(xt, params["lin1_w"], params["lin1_b"], relu=True,
                      out_dtype=jnp.bfloat16)                        # (T*B, H) bf16

    for layer in params["gru"]:
        # Hoisted input projection for BOTH directions: one big MXU matmul with
        # the r/z biases pre-merged -> (T*B, 6H) f32 pre-activations.
        gx = linear_pallas(h, layer["w_ih"], layer["b_gx"], out_dtype=jnp.float32)
        y = bigru_layer_pallas(gx.reshape(T, B, 6 * H), layer["w_hh"], layer["b_hn"], H)
        h = y.reshape(T * B, 2 * H)      # fwd/bwd already interleaved -> no concat

    # linear2 with output lane-padded to a multiple of 128 (dense stores).
    out = linear_pallas(h, params["lin2_w"], params["lin2_b"], out_dtype=jnp.float32)
    out = out[:, :params["n_output"]]
    return out.reshape(T, B, -1).transpose(1, 0, 2)                  # (B, T, n_output)


def regressor_forward(data, params):
    """Regressor.forward (encoder / pose_s2 external — see TODOs)."""
    # TODO(synk): PointNet2Encoder not provided; take its (B, T, n_input) output from `data`.
    x = data["encoder_features"]
    B, T, _ = x.shape

    full_joints = rnn_forward(x, params)                             # (B, T, 72)

    # Input that would feed pose_s2 (STGCN): cat(full_joints, repeated x) along last dim.
    stgcn_in = jnp.concatenate(
        [full_joints.reshape(B, T, 24, 3),
         jnp.broadcast_to(x[:, :, None, :], (B, T, 24, x.shape[-1]))],
        axis=-1,
    )
    del stgcn_in  # TODO(synk): pose_s2 (STGCN) + rot6d_to_rotmat not provided -> pred_rotmats omitted.

    pred = dict(data)
    pred["pred_full_joints"] = full_joints.reshape(B, T, 24, 3)
    return pred


# -----------------------------------------------------------------------------
# Deterministic parameter init (shapes mirror RNN(n_input, 24*3, n_hidden),
# pre-arranged for the kernels: transposed, direction-concatenated, bias-merged).
# -----------------------------------------------------------------------------
def init_params(key, n_input, n_output, n_hidden, n_rnn_layer=2):
    H = n_hidden
    n_out_pad = ((n_output + 127) // 128) * 128
    keys = iter(jax.random.split(key, 4 + n_rnn_layer * 8))

    def u(shape, fan_in):
        s = 1.0 / math.sqrt(fan_in)
        return jax.random.uniform(next(keys), shape, jnp.float32, -s, s)

    p = {"n_hidden": H, "n_output": n_output}
    p["lin1_w"] = u((n_input, H), n_input).astype(jnp.bfloat16)      # linear1: n_input -> H
    p["lin1_b"] = u((1, H), n_input)

    w2 = u((2 * H, n_output), 2 * H)                                 # linear2: 2H -> n_output
    b2 = u((1, n_output), 2 * H)
    p["lin2_w"] = (jnp.zeros((2 * H, n_out_pad), jnp.float32)
                   .at[:, :n_output].set(w2).astype(jnp.bfloat16))   # lane-padded to 128
    p["lin2_b"] = jnp.zeros((1, n_out_pad), jnp.float32).at[:, :n_output].set(b2)

    gru = []
    for layer in range(n_rnn_layer):
        d_in = H if layer == 0 else 2 * H                            # bidirectional feeds 2H to layer 1
        w_ih, b_gx, w_hh, b_hn = [], [], [], []
        for _ in range(2):                                           # fwd, bwd
            wi = u((d_in, 3 * H), H)                                 # weight_ih^T
            wh = u((H, 3 * H), H)                                    # weight_hh^T
            bi = u((1, 3 * H), H)                                    # bias_ih
            bh = u((1, 3 * H), H)                                    # bias_hh
            w_ih.append(wi)
            # pre-merge r/z hidden biases into the hoisted input projection
            b_gx.append(bi + jnp.concatenate(
                [bh[:, :2 * H], jnp.zeros((1, H), jnp.float32)], axis=1))
            w_hh.append(wh)
            b_hn.append(bh[:, 2 * H:])                               # n-gate hidden bias only
        gru.append({
            "w_ih": jnp.concatenate(w_ih, axis=1).astype(jnp.bfloat16),  # (d_in, 6H)
            "b_gx": jnp.concatenate(b_gx, axis=1),                       # (1, 6H) f32
            "w_hh": jnp.stack(w_hh, axis=0).astype(jnp.bfloat16),        # (2, H, 3H)
            "b_hn": jnp.stack(b_hn, axis=0),                             # (2, 1, H) f32
        })
    p["gru"] = gru
    return p


# -----------------------------------------------------------------------------
if __name__ == "__main__":
    B, T = 2, 8
    # Lane-aligned scaled-down stand-ins for n_input=1024, n_hidden=1024, n_output=72.
    N_INPUT, N_HIDDEN, N_OUTPUT = 128, 128, 24 * 3

    key = jax.random.PRNGKey(0)
    k_x, k_p = jax.random.split(key, 2)

    x = jax.random.normal(k_x, (B, T, N_INPUT), jnp.float32)
    params = init_params(k_p, N_INPUT, N_OUTPUT, N_HIDDEN)

    data = {"encoder_features": x}
    pred = regressor_forward(data, params)

    jax.block_until_ready(pred["pred_full_joints"])
    assert pred["pred_full_joints"].shape == (B, T, 24, 3)
    assert bool(jnp.all(jnp.isfinite(pred["pred_full_joints"])))
    print("KERNEL_OK")
</pallas_src>

<mosaic_0001>
module attributes {stable_mosaic.version = 11 : i64} {
  func.func @_linear_relu_kernel(%arg0: i32, %arg1: i32, %arg2: memref<16x128xbf16, #tpu.memory_space<vmem>>, %arg3: memref<128x128xbf16, #tpu.memory_space<vmem>>, %arg4: memref<1x128xf32, #tpu.memory_space<vmem>>, %arg5: memref<16x128xbf16, #tpu.memory_space<vmem>>) attributes {dimension_semantics = [#tpu.dimension_semantics<parallel>, #tpu.dimension_semantics<parallel>], iteration_bounds = array<i64: 1, 1>, scalar_prefetch = 0 : i64, scratch_operands = 0 : i64, tpu.core_type = #tpu.core_type<tc>, window_params = [{transform_indices = @transform_0, window_bounds = array<i64: 16, 128>}, {transform_indices = @transform_1, window_bounds = array<i64: 128, 128>}, {transform_indices = @transform_2, window_bounds = array<i64: 1, 128>}, {transform_indices = @transform_3, window_bounds = array<i64: 16, 128>}]} {
    %c0 = arith.constant 0 : index
    %c0_0 = arith.constant 0 : index
    %0 = vector.load %arg2[%c0, %c0_0] : memref<16x128xbf16, #tpu.memory_space<vmem>>, vector<16x128xbf16>
    %c0_1 = arith.constant 0 : index
    %c0_2 = arith.constant 0 : index
    %1 = vector.load %arg3[%c0_1, %c0_2] : memref<128x128xbf16, #tpu.memory_space<vmem>>, vector<128x128xbf16>
    %cst = arith.constant dense<0.000000e+00> : vector<16x128xf32>
    %2 = tpu.matmul %0, %1, %cst {dimension_numbers = #tpu.dot_dimension_numbers<[1], [0], [0], [1], [0, 0, 1, 1], [], []>} : vector<16x128xbf16>, vector<128x128xbf16>, vector<16x128xf32> -> vector<16x128xf32>
    %c0_3 = arith.constant 0 : index
    %c0_4 = arith.constant 0 : index
    %3 = vector.load %arg4[%c0_3, %c0_4] : memref<1x128xf32, #tpu.memory_space<vmem>>, vector<1x128xf32>
    %4 = vector.broadcast %3 : vector<1x128xf32> to vector<16x128xf32>
    %5 = arith.addf %2, %4 : vector<16x128xf32>
    %cst_5 = arith.constant 0.000000e+00 : f32
    %6 = vector.broadcast %cst_5 : f32 to vector<16x128xf32>
    %7 = arith.maximumf %5, %6 : vector<16x128xf32>
    %8 = arith.truncf %7 : vector<16x128xf32> to vector<16x128xbf16>
    %c0_6 = arith.constant 0 : index
    %c0_7 = arith.constant 0 : index
    %9 = vector.load %arg5[%c0_6, %c0_7] : memref<16x128xbf16, #tpu.memory_space<vmem>>, vector<16x128xbf16>
    tpu.vector_store %arg5[%c0_6, %c0_7], %8 {strides = array<i32>} : memref<16x128xbf16, #tpu.memory_space<vmem>>, vector<16x128xbf16>,
    return
  }
  func.func @transform_0(%arg0: i32, %arg1: i32) -> (i32, i32) {
    %c0_i32 = arith.constant 0 : i32
    %c0_i32_0 = arith.constant 0 : i32
    return %arg0, %c0_i32 : i32, i32
  }
  func.func @transform_1(%arg0: i32, %arg1: i32) -> (i32, i32) {
    %c0_i32 = arith.constant 0 : i32
    %c0_i32_0 = arith.constant 0 : i32
    return %c0_i32, %arg1 : i32, i32
  }
  func.func @transform_2(%arg0: i32, %arg1: i32) -> (i32, i32) {
    %c0_i32 = arith.constant 0 : i32
    %c0_i32_0 = arith.constant 0 : i32
    return %c0_i32, %arg1 : i32, i32
  }
  func.func @transform_3(%arg0: i32, %arg1: i32) -> (i32, i32) {
    %c0_i32 = arith.constant 0 : i32
    return %arg0, %arg1 : i32, i32
  }
}

</mosaic_0001>

<llo_original>
// kernel: tpu_custom_call.1
$region0: #{tpu_custom_call.1}
  #allocation0 [shape = 'u32[]', space=smem, size = 0x4, offset = 0x4, fixed_abs, tag = 'smem constant byte address 0x4 - core index']
  #allocation1 [shape = 'u32[72,128]{1,0:T(1,128)}', space=vmem, size = 0x9000, scoped, tag = 'internal scratch']
  %s0 = inlined_call_operand.hbm [shape: bf16[16,128], index: 0, kind: input, shape index: {}]
  %s1 = inlined_call_operand.hbm [shape: bf16[128,128], index: 1, kind: input, shape index: {}]
  %s2 = inlined_call_operand.vmem [shape: f32[1,128], index: 2, kind: input, shape index: {}]
  %s3 = inlined_call_operand.hbm [shape: bf16[16,128], index: 3, kind: output, shape index: {}]
  %s4 = sld [smem:[#allocation0]]
  $region30: #{tpu_custom_call.1} parent=0
    _
  %s6 = ssub.s32 1, %s4
  %s7 = scalar_select 0, %s6, %s4
  $region1: #{tpu_custom_call.1} parent=0
    #allocation2 [shape = 'u8[4096]{0}', space=vmem, size = 0x1000, scoped, tag = 'input window, operand 0, single buffered']
    #allocation3 [shape = 's32[1]{0}', space=sflag, size = 0x4, scoped, tag = 'scoped memory for tpu_custom_call.1']
    #allocation4 [shape = 's32[1]{0}', space=sflag, size = 0x4, scoped, tag = 'scoped memory for tpu_custom_call.1']
    #allocation5 [shape = 'u8[32768]{0}', space=vmem, size = 0x8000, scoped, tag = 'input window, operand 1, single buffered']
    #allocation6 [shape = 's32[1]{0}', space=sflag, size = 0x4, scoped, tag = 'scoped memory for tpu_custom_call.1']
    #allocation7 [shape = 'u8[4096]{0}', space=vmem, size = 0x1000, scoped, tag = 'output window, operand 0, single buffered']
    %8 = vsyncpa [#allocation3], 0
    %9 = vsyncpa [#allocation6], 0
    %10 = vsyncpa [#allocation4], 0
    // Predicated region
    $region2: #{tpu_custom_call.1} parent=1 // pred_check
      _
    $region3: #{tpu_custom_call.1} parent=1 // pred_check_branch
      %12 = sbr.rel (0) target = $region5
    $region4: #{tpu_custom_call.1} parent=1 // pred_region
      %14 = vsyncadd [#allocation3], 0
      %s15 = sshll.u32 %s0, 4
      %s16 = int_to_ptr.hbm [resolvable:$true] %s15
      %s17 = sshll.u32 [#allocation2], 4
      %s18 = int_to_ptr.vmem [resolvable:$true] %s17
      %23 = dma.hbm_to_vmem [thread:$0]  %s16, 128, %s18, [#allocation3], 64, 64, 4
    $region5: #{tpu_custom_call.1} parent=1 // pred_fallthru
      _
    // Predicated region
    $region6: #{tpu_custom_call.1} parent=1 // pred_check
      _
    $region7: #{tpu_custom_call.1} parent=1 // pred_check_branch
      %25 = sbr.rel (0) target = $region9
    $region8: #{tpu_custom_call.1} parent=1 // pred_region
      %27 = vsyncadd [#allocation6], 0
      %s28 = sshll.u32 %s1, 4
      %s29 = int_to_ptr.hbm [resolvable:$true] %s28
      %s30 = sshll.u32 [#allocation5], 4
      %s31 = int_to_ptr.vmem [resolvable:$true] %s30
      %36 = dma.hbm_to_vmem [thread:$0]  %s29, 1024, %s31, [#allocation6], 64, 64, 4
    $region9: #{tpu_custom_call.1} parent=1 // pred_fallthru
      _
    // Predicated region
    $region10: #{tpu_custom_call.1} parent=1 // pred_check
      _
    $region11: #{tpu_custom_call.1} parent=1 // pred_check_branch
      %38 = sbr.rel (0) target = $region13
    $region12: #{tpu_custom_call.1} parent=1 // pred_region
      _
    $region13: #{tpu_custom_call.1} parent=1 // pred_fallthru
      _
    // Predicated region
    $region14: #{tpu_custom_call.1} parent=1 // pred_check
      _
    $region15: #{tpu_custom_call.1} parent=1 // pred_check_branch
      %40 = sbr.rel (0) target = $region17
    $region16: #{tpu_custom_call.1} parent=1 // pred_region
      %42 = dma.done [#allocation3], 128
    $region17: #{tpu_custom_call.1} parent=1 // pred_fallthru
      _
    // Predicated region
    $region18: #{tpu_custom_call.1} parent=1 // pred_check
      _
    $region19: #{tpu_custom_call.1} parent=1 // pred_check_branch
      %44 = sbr.rel (0) target = $region21
    $region20: #{tpu_custom_call.1} parent=1 // pred_region
      %46 = dma.done [#allocation6], 1024
    $region21: #{tpu_custom_call.1} parent=1 // pred_fallthru
      _
    %v47 = vld [vmem:[#allocation2] sm:$0xf]
    %v48 = vld [vmem:[#allocation2 + $0x4] sm:$0xf]
    %v49 = vld [vmem:[#allocation5] sm:$0xf]
    %v50 = vld [vmem:[#allocation5 + $0x4] sm:$0xf]
    %v51 = vld [vmem:[#allocation5 + $0x8] sm:$0xf]
    %v52 = vld [vmem:[#allocation5 + $0xc] sm:$0xf]
    %v53 = vld [vmem:[#allocation5 + $0x10] sm:$0xf]
    %v54 = vld [vmem:[#allocation5 + $0x14] sm:$0xf]
    %v55 = vld [vmem:[#allocation5 + $0x18] sm:$0xf]
    %v56 = vld [vmem:[#allocation5 + $0x1c] sm:$0xf]
    %v57 = vld [vmem:[#allocation5 + $0x20] sm:$0xf]
    %v58 = vld [vmem:[#allocation5 + $0x24] sm:$0xf]
    %v59 = vld [vmem:[#allocation5 + $0x28] sm:$0xf]
    %v60 = vld [vmem:[#allocation5 + $0x2c] sm:$0xf]
    %v61 = vld [vmem:[#allocation5 + $0x30] sm:$0xf]
    %v62 = vld [vmem:[#allocation5 + $0x34] sm:$0xf]
    %v63 = vld [vmem:[#allocation5 + $0x38] sm:$0xf]
    %v64 = vld [vmem:[#allocation5 + $0x3c] sm:$0xf]
    %v65 = vld [vmem:[%s2] sm:$0x1]
    %v67 = vperm.slane %v65, 0
    %v71 = vunpack.c.l.b16 %v47
    %v72 = vunpack.c.l.b16 %v48
    %v73 = vpack.c.b16 %v72, %v71
    %v91 = vunpack.c.l.b16 %v49
    %v92 = vunpack.c.l.b16 %v50
    %v93 = vunpack.c.l.b16 %v51
    %v94 = vunpack.c.l.b16 %v52
    %v95 = vunpack.c.l.b16 %v53
    %v96 = vunpack.c.l.b16 %v54
    %v97 = vunpack.c.l.b16 %v55
    %v98 = vunpack.c.l.b16 %v56
    %v99 = vunpack.c.l.b16 %v57
    %v100 = vunpack.c.l.b16 %v58
    %v101 = vunpack.c.l.b16 %v59
    %v102 = vunpack.c.l.b16 %v60
    %v103 = vunpack.c.l.b16 %v61
    %v104 = vunpack.c.l.b16 %v62
    %v105 = vunpack.c.l.b16 %v63
    %v106 = vunpack.c.l.b16 %v64
    %v107 = vpack.c.b16 %v92, %v91
    %v108 = vpack.c.b16 %v94, %v93
    %v109 = vpack.c.b16 %v96, %v95
    %v110 = vpack.c.b16 %v98, %v97
    %v111 = vpack.c.b16 %v100, %v99
    %v112 = vpack.c.b16 %v102, %v101
    %v113 = vpack.c.b16 %v104, %v103
    %v114 = vpack.c.b16 %v106, %v105
    %123 = vmatpush.bf16.msra.mxu0 %v114
    %124 = vmatpush.bf16.msra.mxu0 %v113
    %125 = vmatpush.bf16.msra.mxu0 %v112
    %126 = vmatpush.bf16.msra.mxu0 %v111
    %127 = vmatpush.bf16.msra.mxu0 %v110
    %128 = vmatpush.bf16.msra.mxu0 %v109
    %129 = vmatpush.bf16.msra.mxu0 %v108
    %130 = vmatpush.bf16.msra.mxu0 %v107
    %131 = vmatmul.bf16.gmra.mxu0 %v73
    %v132 = vpop.f32.mrf.mxu0
    %v133 = vadd.f32 %v67, %v132
    %v134 = vpop.f32.mrf.mxu0
    %v135 = vadd.f32 %v67, %v134
    %136 = vdwg.mxu0
    %v137 = vmax.f32 %v133, 0.0
    %v138 = vmax.f32 %v135, 0.0
    %v139 = vpack.c.bf16 %v137, %v137
    %v140 = vpack.c.bf16 %v138, %v138
    %141 = vst [vmem:[#allocation7] sm:$0xf] %v139
    %142 = vst [vmem:[#allocation7 + $0x4] sm:$0xf] %v140
    // Predicated region
    $region22: #{tpu_custom_call.1} parent=1 // pred_check
      _
    $region23: #{tpu_custom_call.1} parent=1 // pred_check_branch
      %144 = sbr.rel (0) target = $region25
    $region24: #{tpu_custom_call.1} parent=1 // pred_region
      %146 = vsyncadd [#allocation4], 0
      %s147 = sshll.u32 [#allocation7], 4
      %s148 = int_to_ptr.vmem [resolvable:$true] %s147
      %s149 = sshll.u32 %s3, 4
      %s150 = int_to_ptr.hbm [resolvable:$true] %s149
      %155 = dma.vmem_to_hbm [thread:$0]  %s148, 128, %s150, [#allocation4], 64, 64, 4
    $region25: #{tpu_custom_call.1} parent=1 // pred_fallthru
      _
    // Predicated region
    $region26: #{tpu_custom_call.1} parent=1 // pred_check
      _
    $region27: #{tpu_custom_call.1} parent=1 // pred_check_branch
      %157 = sbr.rel (0) target = $region29
    $region28: #{tpu_custom_call.1} parent=1 // pred_region
      %159 = dma.done [#allocation4], 128
    $region29: #{tpu_custom_call.1} parent=1 // pred_fallthru
      _
    %160 = vsyncpa [#allocation3], 1
    %161 = vsyncpa [#allocation6], 1
    %162 = vsyncpa [#allocation4], 1

</llo_original>
